<compile_context>
chip_gen: v6e
topology: v6e:2x2x1
jax: 0.10.0
libtpu: 0.0.40
codegen_flags: <defaults>
</compile_context>

<pallas_src>
import functools

import jax
import jax.numpy as jnp
from jax import lax
from jax.experimental import pallas as pl
from jax.experimental.pallas import tpu as pltpu


def _layernorm_kernel(x_ref, w_ref, b_ref, o_ref, *, eps):
    # x_ref: (b_blk, C, T) block — T is the lane-dense spatial tile.
    x = x_ref[...].astype(jnp.float32)                  # (b_blk, C, T)
    w = w_ref[...].astype(jnp.float32)                  # (1, C, 1)
    b = b_ref[...].astype(jnp.float32)                  # (1, C, 1)

    mu = jnp.mean(x, axis=1, keepdims=True)             # (b_blk, 1, T)
    xc = x - mu
    var = jnp.mean(xc * xc, axis=1, keepdims=True)      # biased (unbiased=False)
    inv = lax.rsqrt(var + eps)                          # EUP rsqrt

    o_ref[...] = (xc * (inv * w) + b).astype(o_ref.dtype)


def _sublane_pack(itemsize):
    # Sub-32-bit dtypes pack along sublanes; C pads up to this count in VMEM.
    return {4: 8, 2: 16, 1: 32}.get(itemsize, 8)


def _choose_blocking(B, C, HW, itemsize):
    """Choose (b_blk, tile, pad_hw) for blocks of shape (b_blk, C, tile)."""
    pack = _sublane_pack(itemsize)
    c_pad = -(-C // pack) * pack                         # sublane-padded channels

    vmem_budget = 24 << 20      # live double-buffered in+out blocks (v7x-safe)
    target_bytes = 2 << 20      # aim for ~2 MiB of real HBM traffic per block

    def block_vmem(b_blk, tile):                         # 2 bufs (in) + 2 bufs (out)
        return 4 * b_blk * c_pad * tile * itemsize

    def block_traffic(b_blk, tile):                      # real HBM bytes (in + out)
        return 2 * b_blk * C * tile * itemsize

    # Case 1: a full-HW slab (one contiguous HBM copy per batch row) fits VMEM.
    if block_vmem(1, HW) <= vmem_budget:
        divs = [d for d in range(1, B + 1) if B % d == 0]
        b_blk = 1
        for d in divs:                                   # ascending
            if block_vmem(d, HW) > vmem_budget:
                break
            b_blk = d
            if block_traffic(d, HW) >= target_bytes:
                break
        # Prefer >= 2 grid steps (v7x dual TensorCores) when each step would
        # still carry a reasonable amount of traffic.
        if b_blk == B and B > 1:
            smaller = max(d for d in divs if d < b_blk)
            if block_traffic(smaller, HW) >= target_bytes // 4:
                b_blk = smaller
        return b_blk, HW, HW

    # Case 2: HW too large for a full slab — tile it in multiples of 128.
    max_tile = (vmem_budget // (4 * c_pad * itemsize)) // 128 * 128
    max_tile = max(max_tile, 128)
    tile = 0
    for t in range(max_tile, 127, -128):                 # prefer exact divisor of HW
        if HW % t == 0:
            tile = t
            break
    if tile == 0:                                        # no aligned divisor: pad tail
        tile = min(max_tile, -(-HW // 128) * 128)
    pad_hw = -(-HW // tile) * tile
    return 1, tile, pad_hw


def layernorm_pallas(x_nchw, weight, bias, eps=1e-5):
    """Restormer LayerNorm(dim, 'WithBias'): to_3d -> LN over C -> to_4d."""
    B, C, H, W = x_nchw.shape
    HW = H * W
    itemsize = x_nchw.dtype.itemsize

    # Normalizing over the channel axis of (B, C, HW) == PyTorch last-dim
    # LayerNorm on (B, HW, C); no transposes needed, just a reshape.
    x3 = x_nchw.reshape(B, C, HW)

    b_blk, tile, pad_hw = _choose_blocking(B, C, HW, itemsize)
    if pad_hw != HW:
        # Padded spatial positions are normalized independently and discarded.
        x3 = jnp.pad(x3, ((0, 0), (0, 0), (0, pad_hw - HW)))
    n_b = B // b_blk
    n_t = pad_hw // tile

    w3 = weight.reshape(1, C, 1)
    b3 = bias.reshape(1, C, 1)

    # Scoped-VMEM limit consistent with the actual (sublane-padded) block bytes,
    # with headroom; <= 48 MiB so it is always valid on v7x (64 MiB physical).
    pack = _sublane_pack(itemsize)
    c_pad = -(-C // pack) * pack
    block_bytes = 4 * b_blk * c_pad * tile * itemsize
    vmem_limit = int(min(48 << 20, max(32 << 20, block_bytes + (8 << 20))))

    cost = pl.CostEstimate(
        flops=int(7 * B * C * HW),
        transcendentals=int(B * HW),
        bytes_accessed=int(2 * B * C * HW * itemsize + 2 * C * weight.dtype.itemsize),
    )

    kernel = functools.partial(_layernorm_kernel, eps=eps)
    out3 = pl.pallas_call(
        kernel,
        out_shape=jax.ShapeDtypeStruct((B, C, pad_hw), x_nchw.dtype),
        grid_spec=pltpu.PrefetchScalarGridSpec(
            num_scalar_prefetch=0,
            grid=(n_b, n_t),
            in_specs=[
                pl.BlockSpec((b_blk, C, tile), lambda bi, ti: (bi, 0, ti)),
                pl.BlockSpec((1, C, 1), lambda bi, ti: (0, 0, 0)),
                pl.BlockSpec((1, C, 1), lambda bi, ti: (0, 0, 0)),
            ],
            out_specs=pl.BlockSpec((b_blk, C, tile), lambda bi, ti: (bi, 0, ti)),
        ),
        compiler_params=pltpu.CompilerParams(
            dimension_semantics=("parallel", "parallel"),
            vmem_limit_bytes=vmem_limit,
        ),
        cost_estimate=cost,
    )(x3, w3, b3)

    if pad_hw != HW:
        out3 = out3[:, :, :HW]
    return out3.reshape(B, C, H, W)


def layernorm_ref(x_nchw, weight, bias, eps=1e-5):
    """Pure-JAX reference mirroring to_3d -> WithBias_LayerNorm -> to_4d."""
    B, C, H, W = x_nchw.shape
    x = jnp.transpose(x_nchw.reshape(B, C, H * W), (0, 2, 1)).astype(jnp.float32)
    mu = x.mean(-1, keepdims=True)
    var = ((x - mu) ** 2).mean(-1, keepdims=True)        # unbiased=False
    y = (x - mu) / jnp.sqrt(var + eps) * weight.astype(jnp.float32) \
        + bias.astype(jnp.float32)
    y = jnp.transpose(y, (0, 2, 1)).reshape(B, C, H, W)
    return y.astype(x_nchw.dtype)


if __name__ == "__main__":
    key = jax.random.PRNGKey(0)
    B, dim, H, W = 2, 4, 16, 16                          # LayerNorm(dim, 'WithBias')

    kx, kw, kb = jax.random.split(key, 3)
    x = jax.random.normal(kx, (B, dim, H, W), jnp.float32)
    weight = 1.0 + 0.1 * jax.random.normal(kw, (dim,), jnp.float32)
    bias = 0.1 * jax.random.normal(kb, (dim,), jnp.float32)

    out = layernorm_pallas(x, weight, bias)
    out = jax.block_until_ready(out)

    ref = layernorm_ref(x, weight, bias)
    assert out.shape == (B, dim, H, W)
    assert jnp.allclose(out, ref, atol=1e-5, rtol=1e-5), \
        f"max err {jnp.max(jnp.abs(out - ref))}"

    print("KERNEL_OK")
</pallas_src>

<mosaic_0001>
module attributes {stable_mosaic.version = 11 : i64} {
  func.func @_layernorm_kernel(%arg0: i32, %arg1: i32, %arg2: memref<2x4x256xf32, #tpu.memory_space<vmem>>, %arg3: memref<1x4x1xf32, #tpu.memory_space<vmem>>, %arg4: memref<1x4x1xf32, #tpu.memory_space<vmem>>, %arg5: memref<2x4x256xf32, #tpu.memory_space<vmem>>) attributes {dimension_semantics = [#tpu.dimension_semantics<parallel>, #tpu.dimension_semantics<parallel>], iteration_bounds = array<i64: 1, 1>, scalar_prefetch = 0 : i64, scratch_operands = 0 : i64, tpu.core_type = #tpu.core_type<tc>, window_params = [{transform_indices = @transform_0, window_bounds = array<i64: 2, 4, 256>}, {pipeline_mode = #tpu.pipeline_mode<synchronous>, transform_indices = @transform_1, window_bounds = array<i64: 1, 4, 1>}, {pipeline_mode = #tpu.pipeline_mode<synchronous>, transform_indices = @transform_2, window_bounds = array<i64: 1, 4, 1>}, {transform_indices = @transform_3, window_bounds = array<i64: 2, 4, 256>}]} {
    %c0 = arith.constant 0 : index
    %c0_0 = arith.constant 0 : index
    %c0_1 = arith.constant 0 : index
    %0 = vector.load %arg2[%c0, %c0_0, %c0_1] : memref<2x4x256xf32, #tpu.memory_space<vmem>>, vector<2x4x256xf32>
    %c0_2 = arith.constant 0 : index
    %c0_3 = arith.constant 0 : index
    %c0_4 = arith.constant 0 : index
    %1 = vector.load %arg3[%c0_2, %c0_3, %c0_4] : memref<1x4x1xf32, #tpu.memory_space<vmem>>, vector<1x4x1xf32>
    %c0_5 = arith.constant 0 : index
    %c0_6 = arith.constant 0 : index
    %c0_7 = arith.constant 0 : index
    %2 = vector.load %arg4[%c0_5, %c0_6, %c0_7] : memref<1x4x1xf32, #tpu.memory_space<vmem>>, vector<1x4x1xf32>
    %cst = arith.constant dense<0.000000e+00> : vector<2x256xf32>
    %3 = vector.multi_reduction <add>, %0, %cst [1] : vector<2x4x256xf32> to vector<2x256xf32>
    %4 = vector.shape_cast %3 : vector<2x256xf32> to vector<2x1x256xf32>
    %cst_8 = arith.constant 4.000000e+00 : f32
    %5 = vector.broadcast %cst_8 : f32 to vector<2x1x256xf32>
    %6 = arith.divf %4, %5 : vector<2x1x256xf32>
    %7 = vector.broadcast %6 : vector<2x1x256xf32> to vector<2x4x256xf32>
    %8 = arith.subf %0, %7 : vector<2x4x256xf32>
    %9 = arith.mulf %8, %8 : vector<2x4x256xf32>
    %cst_9 = arith.constant dense<0.000000e+00> : vector<2x256xf32>
    %10 = vector.multi_reduction <add>, %9, %cst_9 [1] : vector<2x4x256xf32> to vector<2x256xf32>
    %11 = vector.shape_cast %10 : vector<2x256xf32> to vector<2x1x256xf32>
    %cst_10 = arith.constant 4.000000e+00 : f32
    %12 = vector.broadcast %cst_10 : f32 to vector<2x1x256xf32>
    %13 = arith.divf %11, %12 : vector<2x1x256xf32>
    %cst_11 = arith.constant 9.99999974E-6 : f32
    %14 = vector.broadcast %cst_11 : f32 to vector<2x1x256xf32>
    %15 = arith.addf %13, %14 : vector<2x1x256xf32>
    %16 = math.rsqrt %15 : vector<2x1x256xf32>
    %17 = vector.broadcast %16 : vector<2x1x256xf32> to vector<2x4x256xf32>
    %18 = vector.broadcast %1 : vector<1x4x1xf32> to vector<2x4x256xf32>
    %19 = arith.mulf %17, %18 : vector<2x4x256xf32>
    %20 = arith.mulf %8, %19 : vector<2x4x256xf32>
    %21 = vector.broadcast %2 : vector<1x4x1xf32> to vector<2x4x256xf32>
    %22 = arith.addf %20, %21 : vector<2x4x256xf32>
    %c0_12 = arith.constant 0 : index
    %c0_13 = arith.constant 0 : index
    %c0_14 = arith.constant 0 : index
    %23 = vector.load %arg5[%c0_12, %c0_13, %c0_14] : memref<2x4x256xf32, #tpu.memory_space<vmem>>, vector<2x4x256xf32>
    tpu.vector_store %arg5[%c0_12, %c0_13, %c0_14], %22 {strides = array<i32>} : memref<2x4x256xf32, #tpu.memory_space<vmem>>, vector<2x4x256xf32>,
    return
  }
  func.func @transform_0(%arg0: i32, %arg1: i32) -> (i32, i32, i32) {
    %c0_i32 = arith.constant 0 : i32
    %c0_i32_0 = arith.constant 0 : i32
    return %arg0, %c0_i32, %arg1 : i32, i32, i32
  }
  func.func @transform_1(%arg0: i32, %arg1: i32) -> (i32, i32, i32) {
    %c0_i32 = arith.constant 0 : i32
    %c0_i32_0 = arith.constant 0 : i32
    %c0_i32_1 = arith.constant 0 : i32
    %c0_i32_2 = arith.constant 0 : i32
    return %c0_i32, %c0_i32_0, %c0_i32_1 : i32, i32, i32
  }
  func.func @transform_2(%arg0: i32, %arg1: i32) -> (i32, i32, i32) {
    %c0_i32 = arith.constant 0 : i32
    %c0_i32_0 = arith.constant 0 : i32
    %c0_i32_1 = arith.constant 0 : i32
    %c0_i32_2 = arith.constant 0 : i32
    return %c0_i32, %c0_i32_0, %c0_i32_1 : i32, i32, i32
  }
  func.func @transform_3(%arg0: i32, %arg1: i32) -> (i32, i32, i32) {
    %c0_i32 = arith.constant 0 : i32
    %c0_i32_0 = arith.constant 0 : i32
    return %arg0, %c0_i32, %arg1 : i32, i32, i32
  }
}

</mosaic_0001>

<llo_original>
// kernel: tpu_custom_call.1
$region0: #{tpu_custom_call.1}
  #allocation0 [shape = 'u32[]', space=smem, size = 0x4, offset = 0x4, fixed_abs, tag = 'smem constant byte address 0x4 - core index']
  #allocation1 [shape = 'u32[144,128]{1,0:T(1,128)}', space=vmem, size = 0x12000, scoped, tag = 'internal scratch']
  %s0 = inlined_call_operand.hbm [shape: f32[2,4,256], index: 0, kind: input, shape index: {}]
  %s1 = inlined_call_operand.vmem [shape: f32[1,4,1], index: 1, kind: input, shape index: {}]
  %s2 = inlined_call_operand.vmem [shape: f32[1,4,1], index: 2, kind: input, shape index: {}]
  %s3 = inlined_call_operand.hbm [shape: f32[2,4,256], index: 3, kind: output, shape index: {}]
  %s4 = sld [smem:[#allocation0]]
  $region26: #{tpu_custom_call.1} parent=0
    _
  %s6 = ssub.s32 1, %s4
  %s7 = scalar_select 0, %s6, %s4
  $region1: #{tpu_custom_call.1} parent=0
    #allocation2 [shape = 'u8[8192]{0}', space=vmem, size = 0x2000, scoped, tag = 'input window, operand 0, single buffered']
    #allocation3 [shape = 's32[1]{0}', space=sflag, size = 0x4, scoped, tag = 'scoped memory for tpu_custom_call.1']
    #allocation4 [shape = 's32[1]{0}', space=sflag, size = 0x4, scoped, tag = 'scoped memory for tpu_custom_call.1']
    #allocation5 [shape = 'u8[8192]{0}', space=vmem, size = 0x2000, scoped, tag = 'output window, operand 0, single buffered']
    %8 = vsyncpa [#allocation3], 0
    %9 = vsyncpa [#allocation4], 0
    // Predicated region
    $region2: #{tpu_custom_call.1} parent=1 // pred_check
      _
    $region3: #{tpu_custom_call.1} parent=1 // pred_check_branch
      %11 = sbr.rel (0) target = $region5
    $region4: #{tpu_custom_call.1} parent=1 // pred_region
      %s13 = ssub.s32 256, 256
      %14 = vsyncadd [#allocation3], %s13
      %s15 = sshll.u32 [#allocation2], 4
      %s16 = int_to_ptr.vmem [resolvable:$true] %s15
      %21 = dma.hbm_to_vmem [thread:$0]  %s0, 256, %s16, [#allocation3], 128, 128, 8
    $region5: #{tpu_custom_call.1} parent=1 // pred_fallthru
      _
    // Predicated region
    $region6: #{tpu_custom_call.1} parent=1 // pred_check
      _
    $region7: #{tpu_custom_call.1} parent=1 // pred_check_branch
      %23 = sbr.rel (0) target = $region9
    $region8: #{tpu_custom_call.1} parent=1 // pred_region
      _
    $region9: #{tpu_custom_call.1} parent=1 // pred_fallthru
      _
    // Predicated region
    $region10: #{tpu_custom_call.1} parent=1 // pred_check
      _
    $region11: #{tpu_custom_call.1} parent=1 // pred_check_branch
      %25 = sbr.rel (0) target = $region13
    $region12: #{tpu_custom_call.1} parent=1 // pred_region
      _
    $region13: #{tpu_custom_call.1} parent=1 // pred_fallthru
      _
    // Predicated region
    $region14: #{tpu_custom_call.1} parent=1 // pred_check
      _
    $region15: #{tpu_custom_call.1} parent=1 // pred_check_branch
      %27 = sbr.rel (0) target = $region17
    $region16: #{tpu_custom_call.1} parent=1 // pred_region
      %28 = dma.done [#allocation3], 256
    $region17: #{tpu_custom_call.1} parent=1 // pred_fallthru
      _
    %v29 = vld [vmem:[#allocation2] sm:$0xff]
    %v30 = vld [vmem:[#allocation2 + $0x8] sm:$0xff]
    %v31 = vld [vmem:[%s1] sm:$0xf]
    %v32 = vld [vmem:[%s2] sm:$0xf]
    %v35 = vcombine.high %v29, %v29
    %v36 = vcombine.high %v30, %v30
    %vm39 = vcmask 1043456
    %v40 = vsel %vm39, %v29, 0.0
    %v41 = vrot.slane %v40, 4
    %v42 = vadd.f32 %v40, %v41
    %v43 = vrot.slane %v42, 2
    %v44 = vadd.f32 %v42, %v43
    %v45 = vrot.slane %v44, 1
    %v46 = vadd.f32 %v44, %v45
    %v47 = vsel %vm39, %v35, 0.0
    %v48 = vrot.slane %v47, 4
    %v49 = vadd.f32 %v47, %v48
    %v50 = vrot.slane %v49, 2
    %v51 = vadd.f32 %v49, %v50
    %v52 = vrot.slane %v51, 1
    %v53 = vadd.f32 %v51, %v52
    %v54 = vsel %vm39, %v30, 0.0
    %v55 = vrot.slane %v54, 4
    %v56 = vadd.f32 %v54, %v55
    %v57 = vrot.slane %v56, 2
    %v58 = vadd.f32 %v56, %v57
    %v59 = vrot.slane %v58, 1
    %v60 = vadd.f32 %v58, %v59
    %v61 = vsel %vm39, %v36, 0.0
    %v62 = vrot.slane %v61, 4
    %v63 = vadd.f32 %v61, %v62
    %v64 = vrot.slane %v63, 2
    %v65 = vadd.f32 %v63, %v64
    %v66 = vrot.slane %v65, 1
    %v67 = vadd.f32 %v65, %v66
    %v68 = vrcp.pop 4.0
    %v69 = vmul.f32 %v46, %v68
    %v70 = vmul.f32 %v53, %v68
    %v71 = vmul.f32 %v60, %v68
    %v72 = vmul.f32 %v67, %v68
    %v77 = vcombine.low %v69, %v70
    %v78 = vcombine.low %v71, %v72
    %v81 = vsub.f32 %v29, %v77
    %v82 = vsub.f32 %v30, %v78
    %v83 = vmul.f32 %v81, %v81
    %v84 = vmul.f32 %v82, %v82
    %v87 = vcombine.high %v83, %v83
    %v88 = vcombine.high %v84, %v84
    %v91 = vsel %vm39, %v83, 0.0
    %v92 = vrot.slane %v91, 4
    %v93 = vadd.f32 %v91, %v92
    %v94 = vrot.slane %v93, 2
    %v95 = vadd.f32 %v93, %v94
    %v96 = vrot.slane %v95, 1
    %v97 = vadd.f32 %v95, %v96
    %v98 = vsel %vm39, %v87, 0.0
    %v99 = vrot.slane %v98, 4
    %v100 = vadd.f32 %v98, %v99
    %v101 = vrot.slane %v100, 2
    %v102 = vadd.f32 %v100, %v101
    %v103 = vrot.slane %v102, 1
    %v104 = vadd.f32 %v102, %v103
    %v105 = vsel %vm39, %v84, 0.0
    %v106 = vrot.slane %v105, 4
    %v107 = vadd.f32 %v105, %v106
    %v108 = vrot.slane %v107, 2
    %v109 = vadd.f32 %v107, %v108
    %v110 = vrot.slane %v109, 1
    %v111 = vadd.f32 %v109, %v110
    %v112 = vsel %vm39, %v88, 0.0
    %v113 = vrot.slane %v112, 4
    %v114 = vadd.f32 %v112, %v113
    %v115 = vrot.slane %v114, 2
    %v116 = vadd.f32 %v114, %v115
    %v117 = vrot.slane %v116, 1
    %v118 = vadd.f32 %v116, %v117
    %v119 = vmul.f32 %v97, %v68
    %v120 = vmul.f32 %v104, %v68
    %v121 = vmul.f32 %v111, %v68
    %v122 = vmul.f32 %v118, %v68
    %v123 = vadd.f32 %v119, 1e-05
    %v124 = vadd.f32 %v120, 1e-05
    %v125 = vadd.f32 %v121, 1e-05
    %v126 = vadd.f32 %v122, 1e-05
    %v127 = vrsqrt.pop %v123
    %v128 = vrsqrt.pop %v124
    %v129 = vrsqrt.pop %v125
    %v130 = vrsqrt.pop %v126
    %132 = vset.pattern.permute.xlu0 0
    %133 = vperm.xlu0 %132, %v31
    %v134 = vpop.permute.xlu0 %133
    %v136 = vmul.f32 %v127, %v134
    %v137 = vmul.f32 %v128, %v134
    %v138 = vmul.f32 %v129, %v134
    %v139 = vmul.f32 %v130, %v134
    %v144 = vcombine.low %v136, %v137
    %v145 = vcombine.low %v138, %v139
    %v148 = vmul.f32 %v81, %v144
    %v149 = vmul.f32 %v82, %v145
    %151 = vset.pattern.permute.xlu0 0
    %152 = vperm.xlu0 %151, %v32
    %v153 = vpop.permute.xlu0 %152
    %v155 = vunpack.c.l.s4 839922192
    %v156 = vunpack.c.0.s8 %v155
    %v157 = vlaneseq
    %v158 = vshrl.u32 %v157, 7
    %v159 = vsub.s32 %v156, %v158
    %v160 = vrot.slane %v153, %v159
    %v162 = vadd.f32 %v148, %v160
    %v163 = vadd.f32 %v149, %v160
    %164 = vst [vmem:[#allocation5] sm:$0xff] %v162
    %165 = vst [vmem:[#allocation5 + $0x8] sm:$0xff] %v163
    // Predicated region
    $region18: #{tpu_custom_call.1} parent=1 // pred_check
      _
    $region19: #{tpu_custom_call.1} parent=1 // pred_check_branch
      %167 = sbr.rel (0) target = $region21
    $region20: #{tpu_custom_call.1} parent=1 // pred_region
      %s169 = ssub.s32 256, 256
      %170 = vsyncadd [#allocation4], %s169
      %s171 = sshll.u32 [#allocation5], 4
      %s172 = int_to_ptr.vmem [resolvable:$true] %s171
      %177 = dma.vmem_to_hbm [thread:$0]  %s172, 256, %s3, [#allocation4], 128, 128, 8
    $region21: #{tpu_custom_call.1} parent=1 // pred_fallthru
      _
    // Predicated region
    $region22: #{tpu_custom_call.1} parent=1 // pred_check
      _
    $region23: #{tpu_custom_call.1} parent=1 // pred_check_branch
      %179 = sbr.rel (0) target = $region25
    $region24: #{tpu_custom_call.1} parent=1 // pred_region
      %180 = dma.done [#allocation4], 256
    $region25: #{tpu_custom_call.1} parent=1 // pred_fallthru
      _
    %181 = vsyncpa [#allocation3], 1
    %182 = vsyncpa [#allocation4], 1

</llo_original>
